<compile_context>
chip_gen: v7x
topology: tpu7x:2x2x1
jax: 0.10.0
libtpu: 0.0.40
codegen_flags: <defaults>
</compile_context>

<pallas_src>
import jax
import jax.numpy as jnp
from jax.experimental import pallas as pl
from jax.experimental.pallas import tpu as pltpu


def _round_up(n, m):
    return ((n + m - 1) // m) * m


def _choose_tile_b(B):
    """Batch tile selection.

    B <= 4096: one full-array block (no padding, no extra grid steps on single-TC
    v5e/v6e; the whole problem is < ~1 MB of VMEM anyway).
    B > 4096: lane-aligned blocks (multiple of 128 so output stores are unmasked),
    roughly balanced across blocks, capped at 4096 rows so the double-buffered
    footprint stays small on every generation (and >=2 blocks feed v7x's two TCs).
    """
    if B <= 4096:
        return B
    n_blocks = pl.cdiv(B, 4096)
    return min(4096, _round_up(pl.cdiv(B, n_blocks), 128))


def _classify_softmax_kernel(x_ref, w_ref, o_ref):
    # x_ref: [TB, F]  w_ref: [C, F]  o_ref: [C, TB]
    # Classes on sublanes, batch on lanes.
    logits = jax.lax.dot_general(
        w_ref[...], x_ref[...],
        dimension_numbers=(((1,), (1,)), ((), ())),      # W @ X^T  (NT matmul)
        preferred_element_type=jnp.float32,
    )                                                    # [C, TB], f32
    # Numerically stable softmax over the class axis (axis 0 here == dim=1 of [B,C]).
    m = jnp.max(logits, axis=0, keepdims=True)           # [1, TB]
    e = jnp.exp(logits - m)                              # EUP work ~ C*TB, not 128*TB
    denom = jnp.sum(e, axis=0, keepdims=True)            # [1, TB]
    inv = 1.0 / denom                                    # exact: rows sum to 1 in f32
    o_ref[...] = (e * inv).astype(o_ref.dtype)


def gcn_classifier_layer2_forward(x, w, *, tile_b=None):
    """x: [B, F]; w: [C, F] (PyTorch nn.Linear weight layout, bias=False).

    Returns softmax(x @ w.T, axis=1) with shape [B, C].
    """
    B, F = x.shape
    C, F2 = w.shape
    assert F == F2, (F, F2)

    if tile_b is None:
        tile_b = _choose_tile_b(B)
    else:
        tile_b = int(tile_b)
        if tile_b < B:
            assert tile_b % 128 == 0, "multi-block tile_b must be a multiple of 128"
        else:
            tile_b = B

    # Weight follows x's dtype (documented: passing bf16 x downcasts the weight).
    w = w.astype(x.dtype)

    n_blocks = pl.cdiv(B, tile_b)

    # VMEM budget: double-buffered x / out blocks + (tiny) weight, generous headroom,
    # capped at 48 MiB so we never request v7x's entire 64 MiB per-TC VMEM.
    itm = jnp.dtype(x.dtype).itemsize
    block_bytes = 2 * tile_b * F * itm + 2 * C * tile_b * 4 + 2 * C * F * itm
    vmem_limit = int(min(48 * 1024 * 1024, max(4 * block_bytes, 8 * 1024 * 1024)))

    out_t = pl.pallas_call(
        _classify_softmax_kernel,
        out_shape=jax.ShapeDtypeStruct((C, B), x.dtype),
        grid_spec=pltpu.PrefetchScalarGridSpec(
            num_scalar_prefetch=0,
            grid=(n_blocks,),
            in_specs=[
                pl.BlockSpec((tile_b, F), lambda i: (i, 0)),  # x tile (pipelined over batch)
                pl.BlockSpec((C, F), lambda i: (0, 0)),       # full weight, resident
            ],
            out_specs=pl.BlockSpec((C, tile_b), lambda i: (0, i)),
        ),
        compiler_params=pltpu.CompilerParams(
            dimension_semantics=("parallel",),
            vmem_limit_bytes=vmem_limit,
        ),
    )(x, w)

    # Kernel emits [C, B]; module semantics are [B, C].  Transposing a (3, B) slab
    # in the wrapper is a tiny pass compared to the padded-slab slice it replaces.
    return out_t.T


def reference_forward(x, w):
    return jax.nn.softmax(x @ w.T, axis=1)


if __name__ == "__main__":
    # Module hyperparameters implied by __init__ defaults:
    #   gcn_dim2 = 10, ngraphs = 4 (synthetic batched graph) -> final_dim = 40
    #   n_class  = 3
    gcn_dim2 = 10
    ngraphs = 4
    final_dim = gcn_dim2 * ngraphs   # classify input features
    n_class = 3
    batch = 8

    key = jax.random.PRNGKey(0)
    kx, kw, kx2 = jax.random.split(key, 3)

    # Input to GCN_classifier_layer2.forward: shape [batch, final_dim]
    x = jax.random.normal(kx, (batch, final_dim), dtype=jnp.float32)

    # Deterministic init of classify weight (nn.Linear(final_dim, n_class, bias=False)).
    # PyTorch weight layout is [n_class, final_dim] -- used directly (no transpose).
    bound = 1.0 / (final_dim ** 0.5)
    w = jax.random.uniform(kw, (n_class, final_dim),
                           minval=-bound, maxval=bound, dtype=jnp.float32)

    out = jax.block_until_ready(gcn_classifier_layer2_forward(x, w))
    ref = reference_forward(x, w)
    assert out.shape == (batch, n_class)
    assert jnp.allclose(out, ref, atol=2e-3, rtol=2e-3)
    assert jnp.allclose(jnp.sum(out, axis=1), jnp.ones((batch,)), atol=2e-3)

    # Secondary check: multi-block path with a ragged tail block (300 = 2*128 + 44).
    batch2 = 300
    x2 = jax.random.normal(kx2, (batch2, final_dim), dtype=jnp.float32)
    out2 = jax.block_until_ready(gcn_classifier_layer2_forward(x2, w, tile_b=128))
    ref2 = reference_forward(x2, w)
    assert out2.shape == (batch2, n_class)
    assert jnp.allclose(out2, ref2, atol=2e-3, rtol=2e-3)
    assert jnp.allclose(jnp.sum(out2, axis=1), jnp.ones((batch2,)), atol=2e-3)

    print("KERNEL_OK")
</pallas_src>

<mosaic_0001>
module attributes {stable_mosaic.version = 11 : i64} {
  func.func @_classify_softmax_kernel(%arg0: i32, %arg1: memref<8x40xf32, #tpu.memory_space<vmem>>, %arg2: memref<3x40xf32, #tpu.memory_space<vmem>>, %arg3: memref<3x8xf32, #tpu.memory_space<vmem>>) attributes {dimension_semantics = [#tpu.dimension_semantics<parallel>], iteration_bounds = array<i64: 1>, scalar_prefetch = 0 : i64, scratch_operands = 0 : i64, tpu.core_type = #tpu.core_type<tc>, window_params = [{transform_indices = @transform_0, window_bounds = array<i64: 8, 40>}, {pipeline_mode = #tpu.pipeline_mode<synchronous>, transform_indices = @transform_1, window_bounds = array<i64: 3, 40>}, {transform_indices = @transform_2, window_bounds = array<i64: 3, 8>}]} {
    %c0 = arith.constant 0 : index
    %c0_0 = arith.constant 0 : index
    %0 = vector.load %arg2[%c0, %c0_0] : memref<3x40xf32, #tpu.memory_space<vmem>>, vector<3x40xf32>
    %c0_1 = arith.constant 0 : index
    %c0_2 = arith.constant 0 : index
    %1 = vector.load %arg1[%c0_1, %c0_2] : memref<8x40xf32, #tpu.memory_space<vmem>>, vector<8x40xf32>
    %cst = arith.constant dense<0.000000e+00> : vector<3x8xf32>
    %2 = tpu.matmul %0, %1, %cst {dimension_numbers = #tpu.dot_dimension_numbers<[1], [1], [0], [0], [0, 0, 1, 0], [], []>} : vector<3x40xf32>, vector<8x40xf32>, vector<3x8xf32> -> vector<3x8xf32>
    %cst_3 = arith.constant dense<0xFF800000> : vector<8xf32>
    %3 = vector.multi_reduction <maximumf>, %2, %cst_3 [0] : vector<3x8xf32> to vector<8xf32>
    %4 = vector.shape_cast %3 : vector<8xf32> to vector<1x8xf32>
    %5 = vector.broadcast %4 : vector<1x8xf32> to vector<3x8xf32>
    %6 = arith.subf %2, %5 : vector<3x8xf32>
    %7 = math.exp %6 : vector<3x8xf32>
    %cst_4 = arith.constant dense<0.000000e+00> : vector<8xf32>
    %8 = vector.multi_reduction <add>, %7, %cst_4 [0] : vector<3x8xf32> to vector<8xf32>
    %9 = vector.shape_cast %8 : vector<8xf32> to vector<1x8xf32>
    %cst_5 = arith.constant 1.000000e+00 : f32
    %10 = vector.broadcast %cst_5 : f32 to vector<1x8xf32>
    %11 = arith.divf %10, %9 : vector<1x8xf32>
    %12 = vector.broadcast %11 : vector<1x8xf32> to vector<3x8xf32>
    %13 = arith.mulf %7, %12 : vector<3x8xf32>
    %c0_6 = arith.constant 0 : index
    %c0_7 = arith.constant 0 : index
    %14 = vector.load %arg3[%c0_6, %c0_7] : memref<3x8xf32, #tpu.memory_space<vmem>>, vector<3x8xf32>
    tpu.vector_store %arg3[%c0_6, %c0_7], %13 {strides = array<i32>} : memref<3x8xf32, #tpu.memory_space<vmem>>, vector<3x8xf32>,
    return
  }
  func.func @transform_0(%arg0: i32) -> (i32, i32) {
    %c0_i32 = arith.constant 0 : i32
    %c0_i32_0 = arith.constant 0 : i32
    return %arg0, %c0_i32 : i32, i32
  }
  func.func @transform_1(%arg0: i32) -> (i32, i32) {
    %c0_i32 = arith.constant 0 : i32
    %c0_i32_0 = arith.constant 0 : i32
    %c0_i32_1 = arith.constant 0 : i32
    return %c0_i32, %c0_i32_0 : i32, i32
  }
  func.func @transform_2(%arg0: i32) -> (i32, i32) {
    %c0_i32 = arith.constant 0 : i32
    %c0_i32_0 = arith.constant 0 : i32
    return %c0_i32, %arg0 : i32, i32
  }
}

</mosaic_0001>

<llo_original>
// kernel: tpu_custom_call.1
$region0: #{tpu_custom_call.1}
  #allocation0 [shape = 'u32[]', space=smem, size = 0x4, offset = 0x4, fixed_abs, tag = 'smem constant byte address 0x4 - core index']
  #allocation1 [shape = 'u32[144,128]{1,0:T(1,128)}', space=vmem, size = 0x12000, scoped, tag = 'internal scratch']
  %s0 = inlined_call_operand.hbm [shape: f32[8,40], index: 0, kind: input, shape index: {}]
  %s1 = inlined_call_operand.hbm [shape: f32[3,40], index: 1, kind: input, shape index: {}]
  %s2 = inlined_call_operand.hbm [shape: f32[3,8], index: 2, kind: output, shape index: {}]
  %s3 = sld [smem:[#allocation0]]
  $region26: #{tpu_custom_call.1} parent=0
    _
  %s5 = ssub.s32 1, %s3
  %s6 = scalar_select 0, %s5, %s3
  $region1: #{tpu_custom_call.1} parent=0
    #allocation2 [shape = 'u8[4096]{0}', space=vmem, size = 0x1000, scoped, tag = 'input window, operand 0, single buffered']
    #allocation3 [shape = 's32[1]{0}', space=sflag, size = 0x4, scoped, tag = 'scoped memory for tpu_custom_call.1']
    #allocation4 [shape = 's32[1]{0}', space=sflag, size = 0x4, scoped, tag = 'scoped memory for tpu_custom_call.1']
    #allocation5 [shape = 'u8[2048]{0}', space=vmem, size = 0x800, scoped, tag = 'input window, operand 1, single buffered']
    #allocation6 [shape = 's32[1]{0}', space=sflag, size = 0x4, scoped, tag = 'scoped memory for tpu_custom_call.1']
    #allocation7 [shape = 'u8[2048]{0}', space=vmem, size = 0x800, scoped, tag = 'output window, operand 0, single buffered']
    %7 = vsyncpa [#allocation3], 0
    %8 = vsyncpa [#allocation6], 0
    %9 = vsyncpa [#allocation4], 0
    // Predicated region
    $region2: #{tpu_custom_call.1} parent=1 // pred_check
      _
    $region3: #{tpu_custom_call.1} parent=1 // pred_check_branch
      %11 = sbr.rel (0) target = $region5
    $region4: #{tpu_custom_call.1} parent=1 // pred_region
      %s13 = ssub.s32 128, 128
      %14 = vsyncadd [#allocation3], %s13
      %s16 = sshll.u32 [#allocation2], 4
      %s17 = int_to_ptr.vmem [resolvable:$true] %s16
      %19 = dma.hbm_to_vmem [thread:$0]  %s0, 128, %s17, [#allocation3]
    $region5: #{tpu_custom_call.1} parent=1 // pred_fallthru
      _
    // Predicated region
    $region6: #{tpu_custom_call.1} parent=1 // pred_check
      _
    $region7: #{tpu_custom_call.1} parent=1 // pred_check_branch
      %21 = sbr.rel (0) target = $region9
    $region8: #{tpu_custom_call.1} parent=1 // pred_region
      %s23 = ssub.s32 64, 64
      %24 = vsyncadd [#allocation6], %s23
      %s26 = sshll.u32 [#allocation5], 4
      %s27 = int_to_ptr.vmem [resolvable:$true] %s26
      %29 = dma.hbm_to_vmem [thread:$0]  %s1, 64, %s27, [#allocation6]
    $region9: #{tpu_custom_call.1} parent=1 // pred_fallthru
      _
    // Predicated region
    $region10: #{tpu_custom_call.1} parent=1 // pred_check
      _
    $region11: #{tpu_custom_call.1} parent=1 // pred_check_branch
      %31 = sbr.rel (0) target = $region13
    $region12: #{tpu_custom_call.1} parent=1 // pred_region
      %32 = dma.done [#allocation3], 128
    $region13: #{tpu_custom_call.1} parent=1 // pred_fallthru
      _
    // Predicated region
    $region14: #{tpu_custom_call.1} parent=1 // pred_check
      _
    $region15: #{tpu_custom_call.1} parent=1 // pred_check_branch
      %34 = sbr.rel (0) target = $region17
    $region16: #{tpu_custom_call.1} parent=1 // pred_region
      %35 = dma.done [#allocation6], 64
    $region17: #{tpu_custom_call.1} parent=1 // pred_fallthru
      _
    %v36 = vld [vmem:[#allocation5] sm:$0x7]
    %v37 = vld [vmem:[#allocation2] sm:$0xff]
    %vm38 = vcmask 326656
    %v40 = vsel %vm38, %v36, 0
    %v43 = vsel %vm38, %v37, 0
    %45 = vmatprep.subr.mxu0 0.0
    %46 = vmatpush1.xpose.msra.mxu0 %v43
    %47 = vmatprep.subr.mxu0 0.0
    %48 = vmatpush1.xpose.msra.mxu0 0.0
    %49 = vmatprep.subr.mxu0 0.0
    %50 = vmatpush1.xpose.msra.mxu0 0.0
    %51 = vmatprep.subr.mxu0 0.0
    %52 = vmatpush1.xpose.msra.mxu0 0.0
    %53 = vmatprep.subr.mxu0 0.0
    %54 = vmatpush1.xpose.msra.mxu0 0.0
    %55 = vmatprep.subr.mxu0 0.0
    %56 = vmatpush1.xpose.msra.mxu0 0.0
    %57 = vmatprep.subr.mxu0 0.0
    %58 = vmatpush1.xpose.msra.mxu0 0.0
    %59 = vmatprep.subr.mxu0 0.0
    %60 = vmatpush1.xpose.msra.mxu0 0.0
    %61 = vmatprep.subr.mxu0 0.0
    %62 = vmatpush1.xpose.msra.mxu0 0.0
    %63 = vmatprep.subr.mxu0 0.0
    %64 = vmatpush1.xpose.msra.mxu0 0.0
    %65 = vmatprep.subr.mxu0 0.0
    %66 = vmatpush1.xpose.msra.mxu0 0.0
    %67 = vmatprep.subr.mxu0 0.0
    %68 = vmatpush1.xpose.msra.mxu0 0.0
    %69 = vmatprep.subr.mxu0 0.0
    %70 = vmatpush1.xpose.msra.mxu0 0.0
    %71 = vmatprep.subr.mxu0 0.0
    %72 = vmatpush1.xpose.msra.mxu0 0.0
    %73 = vmatprep.subr.mxu0 0.0
    %74 = vmatpush1.xpose.msra.mxu0 0.0
    %75 = vmatprep.subr.mxu0 0.0
    %76 = vmatpush1.xpose.msra.mxu0 0.0
    %77 = vmatprep.subr.mxu0 0.0
    %78 = vmatpush1.xpose.msra.mxu0 0.0
    %79 = vmatprep.subr.mxu0 0.0
    %80 = vmatpush1.xpose.msra.mxu0 0.0
    %81 = vmatprep.subr.mxu0 0.0
    %82 = vmatpush1.xpose.msra.mxu0 0.0
    %83 = vmatprep.subr.mxu0 0.0
    %84 = vmatpush1.xpose.msra.mxu0 0.0
    %85 = vmatprep.subr.mxu0 0.0
    %86 = vmatpush1.xpose.msra.mxu0 0.0
    %87 = vmatprep.subr.mxu0 0.0
    %88 = vmatpush1.xpose.msra.mxu0 0.0
    %89 = vmatprep.subr.mxu0 0.0
    %90 = vmatpush1.xpose.msra.mxu0 0.0
    %91 = vmatprep.subr.mxu0 0.0
    %92 = vmatpush1.xpose.msra.mxu0 0.0
    %93 = vmatprep.subr.mxu0 0.0
    %94 = vmatpush1.xpose.msra.mxu0 0.0
    %95 = vmatprep.subr.mxu0 0.0
    %96 = vmatpush1.xpose.msra.mxu0 0.0
    %97 = vmatprep.subr.mxu0 0.0
    %98 = vmatpush1.xpose.msra.mxu0 0.0
    %99 = vmatprep.subr.mxu0 0.0
    %100 = vmatpush1.xpose.msra.mxu0 0.0
    %101 = vmatprep.subr.mxu0 0.0
    %102 = vmatpush1.xpose.msra.mxu0 0.0
    %103 = vmatprep.subr.mxu0 0.0
    %104 = vmatpush1.xpose.msra.mxu0 0.0
    %105 = vmatprep.subr.mxu0 0.0
    %106 = vmatpush1.xpose.msra.mxu0 0.0
    %107 = vmatprep.subr.mxu0 0.0
    %108 = vmatpush1.xpose.msra.mxu0 0.0
    %109 = vmatprep.mubr.f32.mxu0 0.0
    %110 = vmatmul.mubr.f32.gmra.mrb[0].mxu0 %v40
    %v111 = vpop.f32.mrb[0].mxu0
    %v112 = vadd.f32 0.0, %v111
    %v113 = vpop.f32.mrb[0].mxu0
    %114 = vdwg.mxu0
    %vm115 = vcmask 59392
    %v116 = vsel %vm115, %v112, -inf
    %v117 = vrot.slane %v116, 4
    %v118 = vmax.f32 %v116, %v117
    %v119 = vrot.slane %v118, 2
    %v120 = vmax.f32 %v118, %v119
    %v121 = vrot.slane %v120, 1
    %v122 = vmax.f32 %v120, %v121
    %v123 = vsub.f32 %v112, %v122
    %v124 = vmul.f32 %v123, 1.442695
    %v125 = vpow.pop %v124
    %v126 = vsel %vm115, %v125, 0.0
    %v127 = vrot.slane %v126, 4
    %v128 = vadd.f32 %v126, %v127
    %v129 = vrot.slane %v128, 2
    %v130 = vadd.f32 %v128, %v129
    %v131 = vrot.slane %v130, 1
    %v132 = vadd.f32 %v130, %v131
    %v133 = vrcp.pop %v132
    %v134 = vmul.f32 1.0, %v133
    %v135 = vmul.f32 %v125, %v134
    %136 = vst.msk [vmem:[#allocation7] sm:$0x7] %vm115, %v135
    // Predicated region
    $region18: #{tpu_custom_call.1} parent=1 // pred_check
      _
    $region19: #{tpu_custom_call.1} parent=1 // pred_check_branch
      %138 = sbr.rel (0) target = $region21
    $region20: #{tpu_custom_call.1} parent=1 // pred_region
      %s140 = ssub.s32 64, 64
      %141 = vsyncadd [#allocation4], %s140
      %s143 = sshll.u32 [#allocation7], 4
      %s144 = int_to_ptr.vmem [resolvable:$true] %s143
      %146 = dma.vmem_to_hbm [thread:$0]  %s144, 64, %s2, [#allocation4]
    $region21: #{tpu_custom_call.1} parent=1 // pred_fallthru
      _
    // Predicated region
    $region22: #{tpu_custom_call.1} parent=1 // pred_check
      _
    $region23: #{tpu_custom_call.1} parent=1 // pred_check_branch
      %148 = sbr.rel (0) target = $region25
    $region24: #{tpu_custom_call.1} parent=1 // pred_region
      %149 = dma.done [#allocation4], 64
    $region25: #{tpu_custom_call.1} parent=1 // pred_fallthru
      _
    %150 = vsyncpa [#allocation3], 1
    %151 = vsyncpa [#allocation6], 1
    %152 = vsyncpa [#allocation4], 1

</llo_original>
